<compile_context>
chip_gen: v5e
topology: v5e:2x2
jax: 0.10.0
libtpu: 0.0.40
codegen_flags: <defaults>
</compile_context>

<pallas_src>
import jax
import jax.numpy as jnp
from jax.experimental import pallas as pl
from jax.experimental.pallas import tpu as pltpu


# ----------------------------- fused Pallas kernel ----------------------------

def _layer(adj, x, w, b, *, apply_relu):
    """Graph-conv layer inside the kernel: adj @ x @ W + b.

    The association is chosen at trace time so the dominant (N,N) matmul runs at
    min(F_in, F_out) columns: (adj @ x) @ W if the layer expands features, else
    adj @ (x @ W)."""
    f_in, f_out = w.shape
    if f_out > f_in:
        out = jnp.dot(jnp.dot(adj, x, preferred_element_type=jnp.float32), w,
                      preferred_element_type=jnp.float32)
    else:
        out = jnp.dot(adj, jnp.dot(x, w, preferred_element_type=jnp.float32),
                      preferred_element_type=jnp.float32)
    out = out + b
    if apply_relu:
        out = jnp.maximum(out, 0.0)
    return out


def _sfgcn_fused_kernel(sadj_ref, ahat_ref, x_ref,
                        w1_ref, b1_ref, w2_ref, b2_ref,
                        g1w_ref, g1b_ref,
                        wfold_ref, bfold_ref,
                        y_ref, emb_ref):
    sadj = sadj_ref[...]
    ahat = ahat_ref[...]

    # SGCN1 (pygcn GCN): gc2( relu(gc1(x, sadj)), sadj );  dropout = identity (eval mode).
    h = _layer(sadj, x_ref[...], w1_ref[...], b1_ref[...], apply_relu=True)
    emb = _layer(sadj, h, w2_ref[...], b2_ref[...], apply_relu=False)
    emb_ref[...] = emb.astype(emb_ref.dtype)

    # PyG GCNConv layer 1 on the dense symmetric-normalized A-hat, then ReLU.
    h1 = _layer(ahat, emb, g1w_ref[...], g1b_ref[...], apply_relu=True)

    # gcn2 + fc head, pre-folded outside the kernel (no ReLU between them):
    #   y = Â @ h1 @ (W2 @ w_fc) + (b2 @ w_fc + b_fc)
    # Computed as one MXU matmul (N,N)@(N,H3) followed by a VPU row-reduction against the
    # folded (1,H3) weight row — avoids any lane-width-1 MXU matmul.
    agg = jnp.dot(ahat, h1, preferred_element_type=jnp.float32)     # (N, H3)
    y = jnp.sum(agg * wfold_ref[...], axis=-1, keepdims=True) + bfold_ref[...]
    y_ref[...] = y.astype(y_ref.dtype)


def sfgcn_fused_call(sadj, ahat, x, params):
    n = x.shape[0]
    h2_dim = params["sgcn1_w2"].shape[1]
    f32 = jnp.float32

    # Fold the fc head into gcn2 (valid because there is no nonlinearity between them).
    # These are tiny one-off XLA ops inside the same jit, outside the Pallas kernel.
    w_fold = jnp.dot(params["gcn2_w"], params["fc_w"])               # (H3, 1)
    b_fold = jnp.dot(params["gcn2_b"], params["fc_w"]) + params["fc_b"]  # (1,)

    vmem = pl.BlockSpec(memory_space=pltpu.MemorySpace.VMEM)
    operands = (
        sadj.astype(f32), ahat.astype(f32), x.astype(f32),
        params["sgcn1_w1"].astype(f32), params["sgcn1_b1"].reshape(1, -1).astype(f32),
        params["sgcn1_w2"].astype(f32), params["sgcn1_b2"].reshape(1, -1).astype(f32),
        params["gcn1_w"].astype(f32), params["gcn1_b"].reshape(1, -1).astype(f32),
        w_fold.reshape(1, -1).astype(f32),   # (1, H3) row for the VPU reduce
        b_fold.reshape(1, 1).astype(f32),
    )
    y_pred, emb = pl.pallas_call(
        _sfgcn_fused_kernel,
        out_shape=(jax.ShapeDtypeStruct((n, 1), f32),
                   jax.ShapeDtypeStruct((n, h2_dim), f32)),
        in_specs=[vmem] * len(operands),
        out_specs=(vmem, vmem),
    )(*operands)
    return y_pred, emb


@jax.jit
def sfgcn_forward(params, x, sadj, ahat):
    """Fused SFGCN forward.  `ahat` is the (static per graph) dense symmetric-normalized
    adjacency built from edge_index once, outside the hot path.  `fadj` from the PyTorch
    signature is unused in the reference forward and therefore not taken here."""
    return sfgcn_fused_call(sadj, ahat, x, params)


# ------------------------------ JAX glue (one-time) ----------------------------

def gcn_norm_dense(edge_index, num_nodes):
    """PyG GCNConv normalization: A-hat = D^{-1/2} (A + I) D^{-1/2}, built densely.

    Matches add_remaining_self_loops for unweighted graphs: every node gets exactly one
    weight-1 self loop even if edge_index already contains some."""
    src, dst = edge_index[0], edge_index[1]
    a = jnp.zeros((num_nodes, num_nodes), jnp.float32).at[dst, src].add(1.0)
    eye = jnp.eye(num_nodes, dtype=jnp.float32)
    a = a * (1.0 - eye) + eye
    deg = a.sum(axis=1)
    dinv = jnp.where(deg > 0, 1.0 / jnp.sqrt(deg), 0.0)
    return dinv[:, None] * a * dinv[None, :]


def normalize_sym(adj):
    """Symmetric normalization (with self loops) for the dense sadj input."""
    a = adj + jnp.eye(adj.shape[0], dtype=adj.dtype)
    deg = a.sum(axis=1)
    dinv = jnp.where(deg > 0, 1.0 / jnp.sqrt(deg), 0.0)
    return dinv[:, None] * a * dinv[None, :]


def xavier(key, shape, gain=1.0):
    fan_in, fan_out = shape[0], shape[1]
    limit = gain * jnp.sqrt(6.0 / (fan_in + fan_out))
    return jax.random.uniform(key, shape, jnp.float32, -limit, limit)


def init_sfgcn_params(key, input_dim, hidden_dim1, hidden_dim2, hidden_dim3, hidden_dim4):
    ks = jax.random.split(key, 8)
    return dict(
        # SGCN1 (pygcn GCN): gc1: input_dim -> hidden_dim1, gc2: hidden_dim1 -> hidden_dim2
        sgcn1_w1=xavier(ks[0], (input_dim, hidden_dim1)),
        sgcn1_b1=jnp.zeros((hidden_dim1,), jnp.float32),
        sgcn1_w2=xavier(ks[1], (hidden_dim1, hidden_dim2)),
        sgcn1_b2=jnp.zeros((hidden_dim2,), jnp.float32),
        # gcn1 / gcn2 (PyG GCNConv): hidden_dim2 -> hidden_dim3 -> hidden_dim4
        gcn1_w=xavier(ks[2], (hidden_dim2, hidden_dim3)),
        gcn1_b=jnp.zeros((hidden_dim3,), jnp.float32),
        gcn2_w=xavier(ks[3], (hidden_dim3, hidden_dim4)),
        gcn2_b=jnp.zeros((hidden_dim4,), jnp.float32),
        # fc: Linear(hidden_dim4, 1)
        fc_w=xavier(ks[4], (hidden_dim4, 1)),
        fc_b=jnp.zeros((1,), jnp.float32),
    )


# --------------------------------- main ----------------------------------------

if __name__ == "__main__":
    N = 16            # number of graph nodes
    INPUT_DIM = 8
    HIDDEN1 = 32
    HIDDEN2 = 16
    HIDDEN3 = 32
    HIDDEN4 = 16

    key = jax.random.PRNGKey(0)
    k_x, k_adj, k_param = jax.random.split(key, 3)

    # Node features.
    x = jax.random.normal(k_x, (N, INPUT_DIM), jnp.float32)

    # Dense structural adjacency (symmetric random graph, then GCN-normalized).
    raw = (jax.random.uniform(k_adj, (N, N)) > 0.7).astype(jnp.float32)
    raw = jnp.maximum(raw, raw.T) * (1.0 - jnp.eye(N, dtype=jnp.float32))
    sadj = normalize_sym(raw)
    # fadj exists in the PyTorch signature but is unused in forward — not passed.

    # edge_index: bidirectional ring graph, shape (2, 2N) -> dense normalized A-hat,
    # built ONCE outside the hot path.
    idx = jnp.arange(N, dtype=jnp.int32)
    nxt = (idx + 1) % N
    edge_index = jnp.stack(
        [jnp.concatenate([idx, nxt]), jnp.concatenate([nxt, idx])], axis=0
    )
    ahat = gcn_norm_dense(edge_index, N)

    params = init_sfgcn_params(k_param, INPUT_DIM, HIDDEN1, HIDDEN2, HIDDEN3, HIDDEN4)

    y_pred, emb = sfgcn_forward(params, x, sadj, ahat)
    jax.block_until_ready((y_pred, emb))

    assert y_pred.shape == (N, 1), y_pred.shape
    assert emb.shape == (N, HIDDEN2), emb.shape
    assert bool(jnp.all(jnp.isfinite(y_pred))) and bool(jnp.all(jnp.isfinite(emb)))
    print("KERNEL_OK")
</pallas_src>

<mosaic_0001>
module attributes {stable_mosaic.version = 11 : i64} {
  func.func @_sfgcn_fused_kernel(%arg0: memref<16x16xf32, #tpu.memory_space<vmem>>, %arg1: memref<16x16xf32, #tpu.memory_space<vmem>>, %arg2: memref<16x8xf32, #tpu.memory_space<vmem>>, %arg3: memref<8x32xf32, #tpu.memory_space<vmem>>, %arg4: memref<1x32xf32, #tpu.memory_space<vmem>>, %arg5: memref<32x16xf32, #tpu.memory_space<vmem>>, %arg6: memref<1x16xf32, #tpu.memory_space<vmem>>, %arg7: memref<16x32xf32, #tpu.memory_space<vmem>>, %arg8: memref<1x32xf32, #tpu.memory_space<vmem>>, %arg9: memref<1x32xf32, #tpu.memory_space<vmem>>, %arg10: memref<1x1xf32, #tpu.memory_space<vmem>>, %arg11: memref<16x1xf32, #tpu.memory_space<vmem>>, %arg12: memref<16x16xf32, #tpu.memory_space<vmem>>) attributes {dimension_semantics = [], scalar_prefetch = 0 : i64, scratch_operands = 0 : i64, tpu.core_type = #tpu.core_type<tc>} {
    %c0 = arith.constant 0 : index
    %c0_0 = arith.constant 0 : index
    %0 = vector.load %arg0[%c0, %c0_0] : memref<16x16xf32, #tpu.memory_space<vmem>>, vector<16x16xf32>
    %c0_1 = arith.constant 0 : index
    %c0_2 = arith.constant 0 : index
    %1 = vector.load %arg1[%c0_1, %c0_2] : memref<16x16xf32, #tpu.memory_space<vmem>>, vector<16x16xf32>
    %c0_3 = arith.constant 0 : index
    %c0_4 = arith.constant 0 : index
    %2 = vector.load %arg2[%c0_3, %c0_4] : memref<16x8xf32, #tpu.memory_space<vmem>>, vector<16x8xf32>
    %c0_5 = arith.constant 0 : index
    %c0_6 = arith.constant 0 : index
    %3 = vector.load %arg3[%c0_5, %c0_6] : memref<8x32xf32, #tpu.memory_space<vmem>>, vector<8x32xf32>
    %c0_7 = arith.constant 0 : index
    %c0_8 = arith.constant 0 : index
    %4 = vector.load %arg4[%c0_7, %c0_8] : memref<1x32xf32, #tpu.memory_space<vmem>>, vector<1x32xf32>
    %cst = arith.constant dense<0.000000e+00> : vector<16x8xf32>
    %5 = tpu.matmul %0, %2, %cst {dimension_numbers = #tpu.dot_dimension_numbers<[1], [0], [0], [1], [0, 0, 1, 1], [], []>} : vector<16x16xf32>, vector<16x8xf32>, vector<16x8xf32> -> vector<16x8xf32>
    %cst_9 = arith.constant dense<0.000000e+00> : vector<16x32xf32>
    %6 = tpu.matmul %5, %3, %cst_9 {dimension_numbers = #tpu.dot_dimension_numbers<[1], [0], [0], [1], [0, 0, 1, 1], [], []>} : vector<16x8xf32>, vector<8x32xf32>, vector<16x32xf32> -> vector<16x32xf32>
    %7 = vector.broadcast %4 : vector<1x32xf32> to vector<16x32xf32>
    %8 = arith.addf %6, %7 : vector<16x32xf32>
    %cst_10 = arith.constant 0.000000e+00 : f32
    %9 = vector.broadcast %cst_10 : f32 to vector<16x32xf32>
    %10 = arith.maximumf %8, %9 : vector<16x32xf32>
    %c0_11 = arith.constant 0 : index
    %c0_12 = arith.constant 0 : index
    %11 = vector.load %arg5[%c0_11, %c0_12] : memref<32x16xf32, #tpu.memory_space<vmem>>, vector<32x16xf32>
    %c0_13 = arith.constant 0 : index
    %c0_14 = arith.constant 0 : index
    %12 = vector.load %arg6[%c0_13, %c0_14] : memref<1x16xf32, #tpu.memory_space<vmem>>, vector<1x16xf32>
    %cst_15 = arith.constant dense<0.000000e+00> : vector<16x16xf32>
    %13 = tpu.matmul %10, %11, %cst_15 {dimension_numbers = #tpu.dot_dimension_numbers<[1], [0], [0], [1], [0, 0, 1, 1], [], []>} : vector<16x32xf32>, vector<32x16xf32>, vector<16x16xf32> -> vector<16x16xf32>
    %cst_16 = arith.constant dense<0.000000e+00> : vector<16x16xf32>
    %14 = tpu.matmul %0, %13, %cst_16 {dimension_numbers = #tpu.dot_dimension_numbers<[1], [0], [0], [1], [0, 0, 1, 1], [], []>} : vector<16x16xf32>, vector<16x16xf32>, vector<16x16xf32> -> vector<16x16xf32>
    %15 = vector.broadcast %12 : vector<1x16xf32> to vector<16x16xf32>
    %16 = arith.addf %14, %15 : vector<16x16xf32>
    %c0_17 = arith.constant 0 : index
    %c0_18 = arith.constant 0 : index
    %17 = vector.load %arg12[%c0_17, %c0_18] : memref<16x16xf32, #tpu.memory_space<vmem>>, vector<16x16xf32>
    tpu.vector_store %arg12[%c0_17, %c0_18], %16 {strides = array<i32>} : memref<16x16xf32, #tpu.memory_space<vmem>>, vector<16x16xf32>,
    %c0_19 = arith.constant 0 : index
    %c0_20 = arith.constant 0 : index
    %18 = vector.load %arg7[%c0_19, %c0_20] : memref<16x32xf32, #tpu.memory_space<vmem>>, vector<16x32xf32>
    %c0_21 = arith.constant 0 : index
    %c0_22 = arith.constant 0 : index
    %19 = vector.load %arg8[%c0_21, %c0_22] : memref<1x32xf32, #tpu.memory_space<vmem>>, vector<1x32xf32>
    %cst_23 = arith.constant dense<0.000000e+00> : vector<16x16xf32>
    %20 = tpu.matmul %1, %16, %cst_23 {dimension_numbers = #tpu.dot_dimension_numbers<[1], [0], [0], [1], [0, 0, 1, 1], [], []>} : vector<16x16xf32>, vector<16x16xf32>, vector<16x16xf32> -> vector<16x16xf32>
    %cst_24 = arith.constant dense<0.000000e+00> : vector<16x32xf32>
    %21 = tpu.matmul %20, %18, %cst_24 {dimension_numbers = #tpu.dot_dimension_numbers<[1], [0], [0], [1], [0, 0, 1, 1], [], []>} : vector<16x16xf32>, vector<16x32xf32>, vector<16x32xf32> -> vector<16x32xf32>
    %22 = vector.broadcast %19 : vector<1x32xf32> to vector<16x32xf32>
    %23 = arith.addf %21, %22 : vector<16x32xf32>
    %cst_25 = arith.constant 0.000000e+00 : f32
    %24 = vector.broadcast %cst_25 : f32 to vector<16x32xf32>
    %25 = arith.maximumf %23, %24 : vector<16x32xf32>
    %cst_26 = arith.constant dense<0.000000e+00> : vector<16x32xf32>
    %26 = tpu.matmul %1, %25, %cst_26 {dimension_numbers = #tpu.dot_dimension_numbers<[1], [0], [0], [1], [0, 0, 1, 1], [], []>} : vector<16x16xf32>, vector<16x32xf32>, vector<16x32xf32> -> vector<16x32xf32>
    %c0_27 = arith.constant 0 : index
    %c0_28 = arith.constant 0 : index
    %27 = vector.load %arg9[%c0_27, %c0_28] : memref<1x32xf32, #tpu.memory_space<vmem>>, vector<1x32xf32>
    %28 = vector.broadcast %27 : vector<1x32xf32> to vector<16x32xf32>
    %29 = arith.mulf %26, %28 : vector<16x32xf32>
    %cst_29 = arith.constant dense<0.000000e+00> : vector<16xf32>
    %30 = vector.multi_reduction <add>, %29, %cst_29 [1] : vector<16x32xf32> to vector<16xf32>
    %31 = vector.shape_cast %30 : vector<16xf32> to vector<16x1xf32>
    %c0_30 = arith.constant 0 : index
    %c0_31 = arith.constant 0 : index
    %32 = vector.load %arg10[%c0_30, %c0_31] : memref<1x1xf32, #tpu.memory_space<vmem>>, vector<1x1xf32>
    %33 = vector.broadcast %32 : vector<1x1xf32> to vector<16x1xf32>
    %34 = arith.addf %31, %33 : vector<16x1xf32>
    %c0_32 = arith.constant 0 : index
    %c0_33 = arith.constant 0 : index
    %35 = vector.load %arg11[%c0_32, %c0_33] : memref<16x1xf32, #tpu.memory_space<vmem>>, vector<16x1xf32>
    tpu.vector_store %arg11[%c0_32, %c0_33], %34 {strides = array<i32>} : memref<16x1xf32, #tpu.memory_space<vmem>>, vector<16x1xf32>,
    return
  }
}

</mosaic_0001>

<llo_original>
// kernel: sfgcn_forward.1
$region0: #{sfgcn_forward.1}
  #allocation0 [shape = 'u32[]', space=smem, size = 0x4, offset = 0x4, fixed_abs, tag = 'smem constant byte address 0x4 - core index']
  #allocation1 [shape = 'u32[72,128]{1,0:T(1,128)}', space=vmem, size = 0x9000, scoped, tag = 'internal scratch']
  #allocation2 [shape = 'f32[1,1]{1,0:T(1,128)S(1)}', space=vmem, size = 0x200, scoped, tag = 'scoped memory for sfgcn_forward.1']
  %s0 = inlined_call_operand.vmem [shape: f32[16,16], index: 0, kind: input, shape index: {}]
  %s1 = inlined_call_operand.vmem [shape: f32[16,16], index: 1, kind: input, shape index: {}]
  %s2 = inlined_call_operand.vmem [shape: f32[16,8], index: 2, kind: input, shape index: {}]
  %s3 = inlined_call_operand.vmem [shape: f32[8,32], index: 3, kind: input, shape index: {}]
  %s4 = inlined_call_operand.vmem [shape: f32[1,32], index: 4, kind: input, shape index: {}]
  %s5 = inlined_call_operand.vmem [shape: f32[32,16], index: 5, kind: input, shape index: {}]
  %s6 = inlined_call_operand.vmem [shape: f32[1,16], index: 6, kind: input, shape index: {}]
  %s7 = inlined_call_operand.vmem [shape: f32[16,32], index: 7, kind: input, shape index: {}]
  %s8 = inlined_call_operand.vmem [shape: f32[1,32], index: 8, kind: input, shape index: {}]
  %s9 = inlined_call_operand.vmem [shape: f32[1,32], index: 9, kind: input, shape index: {}]
  %s10 = inlined_call_operand.<no memory space> [shape: f32[1,1], index: 10, kind: input, shape index: {}]
  %s11 = inlined_call_operand.vmem [shape: f32[16,1], index: 11, kind: output, shape index: {0}]
  %s12 = inlined_call_operand.hbm [shape: f32[16,16], index: 12, kind: output, shape index: {1}]
  %13 = xla_tuple %s11, %s12
  %s14 = sld [smem:[#allocation0]]
  $region62: #{sfgcn_forward.1} parent=0
    _
  %s16 = ssub.s32 1, %s14
  %s17 = scalar_select 0, %s16, %s14
  %v18 = vstv %s10
  %19 = vst [vmem:[#allocation2] sm:$0x1] %v18
  $region1: #{sfgcn_forward.1} parent=0
    #allocation3 [shape = 'u8[8192]{0}', space=vmem, size = 0x2000, scoped, tag = 'output window, operand 1, single buffered']
    #allocation4 [shape = 's32[1]{0}', space=sflag, size = 0x4, scoped, tag = 'scoped memory for sfgcn_forward.1']
    %20 = vsyncpa [#allocation4], 0
    // Predicated region
    $region2: #{sfgcn_forward.1} parent=1 // pred_check
      _
    $region3: #{sfgcn_forward.1} parent=1 // pred_check_branch
      %22 = sbr.rel (0) target = $region5
    $region4: #{sfgcn_forward.1} parent=1 // pred_region
      _
    $region5: #{sfgcn_forward.1} parent=1 // pred_fallthru
      _
    // Predicated region
    $region6: #{sfgcn_forward.1} parent=1 // pred_check
      _
    $region7: #{sfgcn_forward.1} parent=1 // pred_check_branch
      %24 = sbr.rel (0) target = $region9
    $region8: #{sfgcn_forward.1} parent=1 // pred_region
      _
    $region9: #{sfgcn_forward.1} parent=1 // pred_fallthru
      _
    // Predicated region
    $region10: #{sfgcn_forward.1} parent=1 // pred_check
      _
    $region11: #{sfgcn_forward.1} parent=1 // pred_check_branch
      %26 = sbr.rel (0) target = $region13
    $region12: #{sfgcn_forward.1} parent=1 // pred_region
      _
    $region13: #{sfgcn_forward.1} parent=1 // pred_fallthru
      _
    // Predicated region
    $region14: #{sfgcn_forward.1} parent=1 // pred_check
      _
    $region15: #{sfgcn_forward.1} parent=1 // pred_check_branch
      %28 = sbr.rel (0) target = $region17
    $region16: #{sfgcn_forward.1} parent=1 // pred_region
      _
    $region17: #{sfgcn_forward.1} parent=1 // pred_fallthru
      _
    // Predicated region
    $region18: #{sfgcn_forward.1} parent=1 // pred_check
      _
    $region19: #{sfgcn_forward.1} parent=1 // pred_check_branch
      %30 = sbr.rel (0) target = $region21
    $region20: #{sfgcn_forward.1} parent=1 // pred_region
      _
    $region21: #{sfgcn_forward.1} parent=1 // pred_fallthru
      _
    // Predicated region
    $region22: #{sfgcn_forward.1} parent=1 // pred_check
      _
    $region23: #{sfgcn_forward.1} parent=1 // pred_check_branch
      %32 = sbr.rel (0) target = $region25
    $region24: #{sfgcn_forward.1} parent=1 // pred_region
      _
    $region25: #{sfgcn_forward.1} parent=1 // pred_fallthru
      _
    // Predicated region
    $region26: #{sfgcn_forward.1} parent=1 // pred_check
      _
    $region27: #{sfgcn_forward.1} parent=1 // pred_check_branch
      %34 = sbr.rel (0) target = $region29
    $region28: #{sfgcn_forward.1} parent=1 // pred_region
      _
    $region29: #{sfgcn_forward.1} parent=1 // pred_fallthru
      _
    // Predicated region
    $region30: #{sfgcn_forward.1} parent=1 // pred_check
      _
    $region31: #{sfgcn_forward.1} parent=1 // pred_check_branch
      %36 = sbr.rel (0) target = $region33
    $region32: #{sfgcn_forward.1} parent=1 // pred_region
      _
    $region33: #{sfgcn_forward.1} parent=1 // pred_fallthru
      _
    // Predicated region
    $region34: #{sfgcn_forward.1} parent=1 // pred_check
      _
    $region35: #{sfgcn_forward.1} parent=1 // pred_check_branch
      %38 = sbr.rel (0) target = $region37
    $region36: #{sfgcn_forward.1} parent=1 // pred_region
      _
    $region37: #{sfgcn_forward.1} parent=1 // pred_fallthru
      _
    // Predicated region
    $region38: #{sfgcn_forward.1} parent=1 // pred_check
      _
    $region39: #{sfgcn_forward.1} parent=1 // pred_check_branch
      %40 = sbr.rel (0) target = $region41
    $region40: #{sfgcn_forward.1} parent=1 // pred_region
      _
    $region41: #{sfgcn_forward.1} parent=1 // pred_fallthru
      _
    // Predicated region
    $region42: #{sfgcn_forward.1} parent=1 // pred_check
      _
    $region43: #{sfgcn_forward.1} parent=1 // pred_check_branch
      %42 = sbr.rel (0) target = $region45
    $region44: #{sfgcn_forward.1} parent=1 // pred_region
      _
    $region45: #{sfgcn_forward.1} parent=1 // pred_fallthru
      _
    %v43 = vld [vmem:[%s0] sm:$0xff]
    %v44 = vld [vmem:[%s0 + $0x8] sm:$0xff]
    %v45 = vld [vmem:[%s1] sm:$0xff]
    %v46 = vld [vmem:[%s1 + $0x8] sm:$0xff]
    %v47 = vld [vmem:[%s2] sm:$0xff]
    %v48 = vld [vmem:[%s2 + $0x8] sm:$0xff]
    %v49 = vld [vmem:[%s3] sm:$0xff]
    %v50 = vld [vmem:[%s4] sm:$0x1]
    %vm51 = vcmask 130048
    %v53 = vsel %vm51, %v43, 0
    %v56 = vsel %vm51, %v44, 0
    %58 = vmatpush.msra.mxu0 0.0
    %59 = vmatpush.msra.mxu0 0.0
    %60 = vmatpush.msra.mxu0 0.0
    %61 = vmatpush.msra.mxu0 0.0
    %62 = vmatpush.msra.mxu0 0.0
    %63 = vmatpush.msra.mxu0 0.0
    %64 = vmatpush.msra.mxu0 0.0
    %65 = vmatpush.msra.mxu0 0.0
    %66 = vmatpush.msra.mxu0 0.0
    %67 = vmatpush.msra.mxu0 0.0
    %68 = vmatpush.msra.mxu0 0.0
    %69 = vmatpush.msra.mxu0 0.0
    %70 = vmatpush.msra.mxu0 0.0
    %71 = vmatpush.msra.mxu0 0.0
    %72 = vmatpush.msra.mxu0 %v48
    %73 = vmatpush.msra.mxu0 %v47
    %74 = vmatmul.f32.gmra.mxu0 %v53
    %v75 = vpop.f32.mrf.mxu0
    %v76 = vadd.f32 0.0, %v75
    %77 = vmatmul.f32.gmra.mxu0 %v56
    %v78 = vpop.f32.mrf.mxu0
    %v79 = vadd.f32 0.0, %v78
    %80 = vdwg.mxu0
    %v82 = vperm.slane %v50, 0
    %vm84 = vcmask 64512
    %v86 = vsel %vm84, %v76, 0
    %v89 = vsel %vm84, %v79, 0
    %91 = vmatpush.msra.mxu0 0.0
    %92 = vmatpush.msra.mxu0 0.0
    %93 = vmatpush.msra.mxu0 0.0
    %94 = vmatpush.msra.mxu0 0.0
    %95 = vmatpush.msra.mxu0 0.0
    %96 = vmatpush.msra.mxu0 0.0
    %97 = vmatpush.msra.mxu0 0.0
    %98 = vmatpush.msra.mxu0 0.0
    %99 = vmatpush.msra.mxu0 0.0
    %100 = vmatpush.msra.mxu0 0.0
    %101 = vmatpush.msra.mxu0 0.0
    %102 = vmatpush.msra.mxu0 0.0
    %103 = vmatpush.msra.mxu0 0.0
    %104 = vmatpush.msra.mxu0 0.0
    %105 = vmatpush.msra.mxu0 0.0
    %106 = vmatpush.msra.mxu0 %v49
    %107 = vmatmul.f32.gmra.mxu0 %v86
    %v108 = vpop.f32.mrf.mxu0
    %v109 = vadd.f32 %v82, %v108
    %110 = vmatmul.f32.gmra.mxu0 %v89
    %v111 = vpop.f32.mrf.mxu0
    %v112 = vadd.f32 %v82, %v111
    %113 = vdwg.mxu0
    %v114 = vmax.f32 %v109, 0.0
    %v115 = vmax.f32 %v112, 0.0
    %v116 = vld [vmem:[%s5] sm:$0xff]
    %v117 = vld [vmem:[%s5 + $0x8] sm:$0xff]
    %v118 = vld [vmem:[%s5 + $0x10] sm:$0xff]
    %v119 = vld [vmem:[%s5 + $0x18] sm:$0xff]
    %v120 = vld [vmem:[%s6] sm:$0x1]
    %vm121 = vcmask 261120
    %v123 = vsel %vm121, %v114, 0
    %v126 = vsel %vm121, %v115, 0
    %128 = vmatpush.msra.mxu0 0.0
    %129 = vmatpush.msra.mxu0 0.0
    %130 = vmatpush.msra.mxu0 0.0
    %131 = vmatpush.msra.mxu0 0.0
    %132 = vmatpush.msra.mxu0 0.0
    %133 = vmatpush.msra.mxu0 0.0
    %134 = vmatpush.msra.mxu0 0.0
    %135 = vmatpush.msra.mxu0 0.0
    %136 = vmatpush.msra.mxu0 0.0
    %137 = vmatpush.msra.mxu0 0.0
    %138 = vmatpush.msra.mxu0 0.0
    %139 = vmatpush.msra.mxu0 0.0
    %140 = vmatpush.msra.mxu0 %v119
    %141 = vmatpush.msra.mxu0 %v118
    %142 = vmatpush.msra.mxu0 %v117
    %143 = vmatpush.msra.mxu0 %v116
    %144 = vmatmul.f32.gmra.mxu0 %v123
    %v145 = vpop.f32.mrf.mxu0
    %v146 = vadd.f32 0.0, %v145
    %147 = vmatmul.f32.gmra.mxu0 %v126
    %v148 = vpop.f32.mrf.mxu0
    %v149 = vadd.f32 0.0, %v148
    %150 = vdwg.mxu0
    %v152 = vperm.slane %v120, 0
    %154 = vmatpush.msra.mxu0 0.0
    %155 = vmatpush.msra.mxu0 0.0
    %156 = vmatpush.msra.mxu0 0.0
    %157 = vmatpush.msra.mxu0 0.0
    %158 = vmatpush.msra.mxu0 0.0
    %159 = vmatpush.msra.mxu0 0.0
    %160 = vmatpush.msra.mxu0 0.0
    %161 = vmatpush.msra.mxu0 0.0
    %162 = vmatpush.msra.mxu0 0.0
    %163 = vmatpush.msra.mxu0 0.0
    %164 = vmatpush.msra.mxu0 0.0
    %165 = vmatpush.msra.mxu0 0.0
    %166 = vmatpush.msra.mxu0 0.0
    %167 = vmatpush.msra.mxu0 0.0
    %168 = vmatpush.msra.mxu0 %v149
    %169 = vmatpush.msra.mxu0 %v146
    %170 = vmatmul.f32.gmra.mxu0 %v53
    %v171 = vpop.f32.mrf.mxu0
    %v172 = vadd.f32 %v152, %v171
    %173 = vmatmul.f32.gmra.mxu0 %v56
    %v174 = vpop.f32.mrf.mxu0
    %v175 = vadd.f32 %v152, %v174
    %176 = vdwg.mxu0
    %177 = vst.msk [vmem:[#allocation3] sm:$0xff] %vm51, %v172
    %178 = vst.msk [vmem:[#allocation3 + $0x8] sm:$0xff] %vm51, %v175
    %v179 = vld [vmem:[%s7] sm:$0xff]
    %v180 = vld [vmem:[%s7 + $0x8] sm:$0xff]
    %v181 = vld [vmem:[%s8] sm:$0x1]
    %v183 = vsel %vm51, %v45, 0
    %v186 = vsel %vm51, %v46, 0
    %188 = vmatpush.msra.mxu0 0.0
    %189 = vmatpush.msra.mxu0 0.0
    %190 = vmatpush.msra.mxu0 0.0
    %191 = vmatpush.msra.mxu0 0.0
    %192 = vmatpush.msra.mxu0 0.0
    %193 = vmatpush.msra.mxu0 0.0
    %194 = vmatpush.msra.mxu0 0.0
    %195 = vmatpush.msra.mxu0 0.0
    %196 = vmatpush.msra.mxu0 0.0
    %197 = vmatpush.msra.mxu0 0.0
    %198 = vmatpush.msra.mxu0 0.0
    %199 = vmatpush.msra.mxu0 0.0
    %200 = vmatpush.msra.mxu0 0.0
    %201 = vmatpush.msra.mxu0 0.0
    %202 = vmatpush.msra.mxu0 %v175
    %203 = vmatpush.msra.mxu0 %v172
    %204 = vmatmul.f32.gmra.mxu0 %v183
    %v205 = vpop.f32.mrf.mxu0
    %v206 = vadd.f32 0.0, %v205
    %207 = vmatmul.f32.gmra.mxu0 %v186
    %v208 = vpop.f32.mrf.mxu0
    %v209 = vadd.f32 0.0, %v208
    %210 = vdwg.mxu0
    %v212 = vperm.slane %v181, 0
    %v215 = vsel %vm51, %v206, 0
    %v218 = vsel %vm51, %v209, 0
    %220 = vmatpush.msra.mxu0 0.0
    %221 = vmatpush.msra.mxu0 0.0
    %222 = vmatpush.msra.mxu0 0.0
    %223 = vmatpush.msra.mxu0 0.0
    %224 = vmatpush.msra.mxu0 0.0
    %225 = vmatpush.msra.mxu0 0.0
    %226 = vmatpush.msra.mxu0 0.0
    %227 = vmatpush.msra.mxu0 0.0
    %228 = vmatpush.msra.mxu0 0.0
    %229 = vmatpush.msra.mxu0 0.0
    %230 = vmatpush.msra.mxu0 0.0
    %231 = vmatpush.msra.mxu0 0.0
    %232 = vmatpush.msra.mxu0 0.0
    %233 = vmatpush.msra.mxu0 0.0
    %234 = vmatpush.msra.mxu0 %v180
    %235 = vmatpush.msra.mxu0 %v179
    %236 = vmatmul.f32.gmra.mxu0 %v215
    %v237 = vpop.f32.mrf.mxu0
    %v238 = vadd.f32 %v212, %v237
    %239 = vmatmul.f32.gmra.mxu0 %v218
    %v240 = vpop.f32.mrf.mxu0
    %v241 = vadd.f32 %v212, %v240
    %242 = vdwg.mxu0
    %v243 = vmax.f32 %v238, 0.0
    %v244 = vmax.f32 %v241, 0.0
    %245 = vmatpush.msra.mxu0 0.0
    %246 = vmatpush.msra.mxu0 0.0
    %247 = vmatpush.msra.mxu0 0.0
    %248 = vmatpush.msra.mxu0 0.0
    %249 = vmatpush.msra.mxu0 0.0
    %250 = vmatpush.msra.mxu0 0.0
    %251 = vmatpush.msra.mxu0 0.0
    %252 = vmatpush.msra.mxu0 0.0
    %253 = vmatpush.msra.mxu0 0.0
    %254 = vmatpush.msra.mxu0 0.0
    %255 = vmatpush.msra.mxu0 0.0
    %256 = vmatpush.msra.mxu0 0.0
    %257 = vmatpush.msra.mxu0 0.0
    %258 = vmatpush.msra.mxu0 0.0
    %259 = vmatpush.msra.mxu0 %v244
    %260 = vmatpush.msra.mxu0 %v243
    %261 = vmatmul.f32.gmra.mxu0 %v183
    %v262 = vpop.f32.mrf.mxu0
    %v263 = vadd.f32 0.0, %v262
    %264 = vmatmul.f32.gmra.mxu0 %v186
    %v265 = vpop.f32.mrf.mxu0
    %v266 = vadd.f32 0.0, %v265
    %267 = vdwg.mxu0
    %v268 = vld [vmem:[%s9] sm:$0x1]
    %v270 = vperm.slane %v268, 0
    %v272 = vmul.f32 %v263, %v270
    %v273 = vmul.f32 %v266, %v270
    %v274 = vsel %vm121, %v272, 0.0
    %275 = vadd.xlane.f32.xlu0 %v274
    %v276 = vpop.xlane.xlu0 %275
    %v277 = vsel %vm121, %v273, 0.0
    %278 = vadd.xlane.f32.xlu0 %v277
    %v279 = vpop.xlane.xlu0 %278
    %v280 = vld [vmem:[#allocation2] sm:$0x1]
    %v282 = vperm.slane %v280, 0
    %v284 = vadd.f32 %v276, %v282
    %v285 = vadd.f32 %v279, %v282
    %vm286 = vcmask 7168
    %287 = vst.msk [vmem:[%s11] sm:$0xff] %vm286, %v284
    %288 = vst.msk [vmem:[%s11 + $0x8] sm:$0xff] %vm286, %v285
    // Predicated region
    $region46: #{sfgcn_forward.1} parent=1 // pred_check
      _
    $region47: #{sfgcn_forward.1} parent=1 // pred_check_branch
      %290 = sbr.rel (0) target = $region49
    $region48: #{sfgcn_forward.1} parent=1 // pred_region
      _
    $region49: #{sfgcn_forward.1} parent=1 // pred_fallthru
      _
    // Predicated region
    $region50: #{sfgcn_forward.1} parent=1 // pred_check
      _
    $region51: #{sfgcn_forward.1} parent=1 // pred_check_branch
      %292 = sbr.rel (0) target = $region53
    $region52: #{sfgcn_forward.1} parent=1 // pred_region
      %294 = vsyncadd [#allocation4], 0
      %s295 = sshll.u32 [#allocation3], 4
      %s296 = int_to_ptr.vmem [resolvable:$true] %s295
      %s297 = sshll.u32 %s12, 4
      %s298 = int_to_ptr.hbm [resolvable:$true] %s297
      %303 = dma.vmem_to_hbm [thread:$0]  %s296, 256, %s298, [#allocation4], 128, 128, 8
    $region53: #{sfgcn_forward.1} parent=1 // pred_fallthru
      _
    // Predicated region
    $region54: #{sfgcn_forward.1} parent=1 // pred_check
      _
    $region55: #{sfgcn_forward.1} parent=1 // pred_check_branch
      %305 = sbr.rel (0) target = $region57
    $region56: #{sfgcn_forward.1} parent=1 // pred_region
      _
    $region57: #{sfgcn_forward.1} parent=1 // pred_fallthru
      _
    // Predicated region
    $region58: #{sfgcn_forward.1} parent=1 // pred_check
      _
    $region59: #{sfgcn_forward.1} parent=1 // pred_check_branch
      %307 = sbr.rel (0) target = $region61
    $region60: #{sfgcn_forward.1} parent=1 // pred_region
      %309 = dma.done [#allocation4], 256
    $region61: #{sfgcn_forward.1} parent=1 // pred_fallthru
      _
    %310 = vsyncpa [#allocation4], 1

</llo_original>
